<compile_context>
chip_gen: v5e
topology: v5e:2x2
jax: 0.10.0
libtpu: 0.0.40
codegen_flags: <defaults>
</compile_context>

<pallas_src>
import jax
import jax.numpy as jnp
from jax.experimental import pallas as pl
from jax.experimental.pallas import tpu as pltpu


def _round_up(x, m):
    return ((x + m - 1) // m) * m


def qnet_kernel(x_ref, w1_ref, b1_ref, w2_ref, b2_ref, w3_ref, b3_ref, o_ref):
    """Fused 3-layer MLP on one (TB, state_dim) batch tile. All operands in VMEM."""
    x = x_ref[...].astype(jnp.bfloat16)                       # f32 -> bf16 on VPU

    # Layer 1: bf16 MXU matmul, f32 accumulate; bias + ReLU in f32.
    h = jnp.dot(x, w1_ref[...], preferred_element_type=jnp.float32) + b1_ref[...]
    h = jnp.maximum(h, 0.0)

    # Layer 2
    h = jnp.dot(h.astype(jnp.bfloat16), w2_ref[...],
                preferred_element_type=jnp.float32) + b2_ref[...]
    h = jnp.maximum(h, 0.0)

    # Layer 3 — lane-dense padded output (real action_dim columns sliced by wrapper).
    q = jnp.dot(h.astype(jnp.bfloat16), w3_ref[...],
                preferred_element_type=jnp.float32) + b3_ref[...]
    o_ref[...] = q.astype(o_ref.dtype)                        # bf16 lane-dense store


def pack_params(params):
    """Pad hidden/output feature dims to 128-lane multiples; leave state_dim raw.

    Zero padding is inert: padded hidden/output columns get zero weights and
    zero bias (ReLU(0)=0), and padded weight rows only ever multiply zero
    activations, so the real outputs are unaffected. The wrapper slices the
    real [:B, :action_dim] window.
    """
    state_dim, hidden = params["w1"].shape
    action_dim = params["w3"].shape[1]
    H = _round_up(hidden, 128)        # lane-dense hidden (also = v5e MXU width)
    A = _round_up(action_dim, 128)    # lane-dense output writeback

    def pad2(w, rows, cols):
        return jnp.pad(w, ((0, rows - w.shape[0]), (0, cols - w.shape[1])))

    def pad1(b, cols):
        b = jnp.asarray(b, jnp.float32).reshape(1, -1)
        return jnp.pad(b, ((0, 0), (0, cols - b.shape[1])))

    w1 = pad2(params["w1"], state_dim, H).astype(jnp.bfloat16)   # (S, H) bf16
    w2 = pad2(params["w2"], H, H).astype(jnp.bfloat16)           # (H, H) bf16
    w3 = pad2(params["w3"], H, A).astype(jnp.bfloat16)           # (H, A) bf16
    b1 = pad1(params["b1"], H)                                   # (1, H) f32
    b2 = pad1(params["b2"], H)                                   # (1, H) f32
    b3 = pad1(params["b3"], A)                                   # (1, A) f32
    return (w1, b1, w2, b2, w3, b3), H, A


def _choose_batch_tiling(B, tb_max):
    """Pick (TB, B_pad, n_tiles).

    * As few grid steps as possible (per-step overhead ~0.35 us), but at least 2
      when B >= 16 so the "parallel" axis can shard across v7x's two TensorCores.
    * TB derived from B (multiple of 8) so batch over-padding stays < 8 rows/tile.
    """
    n_tiles = max(pl.cdiv(B, tb_max), min(2, pl.cdiv(B, 8)))
    tb = _round_up(pl.cdiv(B, n_tiles), 8)
    return tb, n_tiles * tb, n_tiles


def q_network_forward(state, params, *, tb_max=4096):
    """state: (B, state_dim) float32; params: dict of unpadded weights/biases."""
    B, state_dim = state.shape
    action_dim = params["w3"].shape[1]

    (w1, b1, w2, b2, w3, b3), H, A = pack_params(params)
    TB, B_pad, n_tiles = _choose_batch_tiling(B, tb_max)

    # Minimal batch padding of the raw f32 state (feature dim untouched).
    x = state if B_pad == B else jnp.pad(state, ((0, B_pad - B), (0, 0)))

    weight_bytes = 2 * (w1.size + w2.size + w3.size) + 4 * (b1.size + b2.size + b3.size)
    cost = pl.CostEstimate(
        flops=2 * B_pad * (state_dim * H + H * H + H * A),   # padded FLOPs actually issued
        transcendentals=0,
        bytes_accessed=x.size * 4 + weight_bytes + B_pad * A * 2,
    )

    out = pl.pallas_call(
        qnet_kernel,
        out_shape=jax.ShapeDtypeStruct((B_pad, A), jnp.bfloat16),
        grid=(n_tiles,),
        in_specs=[
            pl.BlockSpec((TB, state_dim), lambda i: (i, 0)),   # streamed raw state tile
            pl.BlockSpec((state_dim, H), lambda i: (0, 0)),    # resident weights/biases
            pl.BlockSpec((1, H), lambda i: (0, 0)),
            pl.BlockSpec((H, H), lambda i: (0, 0)),
            pl.BlockSpec((1, H), lambda i: (0, 0)),
            pl.BlockSpec((H, A), lambda i: (0, 0)),
            pl.BlockSpec((1, A), lambda i: (0, 0)),
        ],
        out_specs=pl.BlockSpec((TB, A), lambda i: (i, 0)),     # lane-dense bf16 output
        compiler_params=pltpu.CompilerParams(
            dimension_semantics=("parallel",)),                # shard batch across TCs (v7x)
        cost_estimate=cost,
    )(x, w1, b1, w2, b2, w3, b3)

    # Strip batch/lane padding; return f32 like the PyTorch module.
    return out[:B, :action_dim].astype(jnp.float32)


def init_params(key, state_dim, action_dim, hidden=64):
    """Deterministic init mimicking nn.Linear default: U(-1/sqrt(fan_in), ...)."""
    ks = jax.random.split(key, 6)

    def lin(kw, kb, fan_in, fan_out):
        bound = 1.0 / jnp.sqrt(fan_in)
        w = jax.random.uniform(kw, (fan_in, fan_out), jnp.float32, -bound, bound)
        b = jax.random.uniform(kb, (1, fan_out), jnp.float32, -bound, bound)
        return w, b

    w1, b1 = lin(ks[0], ks[1], state_dim, hidden)
    w2, b2 = lin(ks[2], ks[3], hidden, hidden)
    w3, b3 = lin(ks[4], ks[5], hidden, action_dim)
    return {"w1": w1, "b1": b1, "w2": w2, "b2": b2, "w3": w3, "b3": b3}


def q_network_ref(state, p):
    """Pure-JAX f32 reference for correctness checking."""
    h1 = jax.nn.relu(state @ p["w1"] + p["b1"])
    h2 = jax.nn.relu(h1 @ p["w2"] + p["b2"])
    return h2 @ p["w3"] + p["b3"]


if __name__ == "__main__":
    key = jax.random.PRNGKey(0)
    k_state, k_params, k_state2 = jax.random.split(key, 3)

    batch, state_dim, action_dim = 2, 8, 4
    params = init_params(k_params, state_dim, action_dim)

    # Small single-tile batch.
    state = jax.random.normal(k_state, (batch, state_dim), jnp.float32)
    q = jax.block_until_ready(q_network_forward(state, params))
    q_ref = q_network_ref(state, params)
    assert q.shape == (batch, action_dim)
    # bf16 matmul inputs / bf16 output store (f32 accumulation) -> loose tolerance.
    assert jnp.allclose(q, q_ref, atol=3e-2, rtol=3e-2), (
        f"max abs err {jnp.max(jnp.abs(q - q_ref))}")

    # Larger batch: exercises grid=(2,) (both TensorCores on v7x) and batch padding.
    state2 = jax.random.normal(k_state2, (40, state_dim), jnp.float32)
    q2 = jax.block_until_ready(q_network_forward(state2, params))
    q2_ref = q_network_ref(state2, params)
    assert q2.shape == (40, action_dim)
    assert jnp.allclose(q2, q2_ref, atol=3e-2, rtol=3e-2), (
        f"max abs err {jnp.max(jnp.abs(q2 - q2_ref))}")

    print("KERNEL_OK")
</pallas_src>

<mosaic_0001>
module attributes {stable_mosaic.version = 11 : i64} {
  func.func @qnet_kernel(%arg0: i32, %arg1: memref<8x8xf32, #tpu.memory_space<vmem>>, %arg2: memref<8x128xbf16, #tpu.memory_space<vmem>>, %arg3: memref<1x128xf32, #tpu.memory_space<vmem>>, %arg4: memref<128x128xbf16, #tpu.memory_space<vmem>>, %arg5: memref<1x128xf32, #tpu.memory_space<vmem>>, %arg6: memref<128x128xbf16, #tpu.memory_space<vmem>>, %arg7: memref<1x128xf32, #tpu.memory_space<vmem>>, %arg8: memref<8x128xbf16, #tpu.memory_space<vmem>>) attributes {dimension_semantics = [#tpu.dimension_semantics<parallel>], iteration_bounds = array<i64: 1>, scalar_prefetch = 0 : i64, scratch_operands = 0 : i64, tpu.core_type = #tpu.core_type<tc>, window_params = [{transform_indices = @transform_0, window_bounds = array<i64: 8, 8>}, {pipeline_mode = #tpu.pipeline_mode<synchronous>, transform_indices = @transform_1, window_bounds = array<i64: 8, 128>}, {pipeline_mode = #tpu.pipeline_mode<synchronous>, transform_indices = @transform_2, window_bounds = array<i64: 1, 128>}, {pipeline_mode = #tpu.pipeline_mode<synchronous>, transform_indices = @transform_3, window_bounds = array<i64: 128, 128>}, {pipeline_mode = #tpu.pipeline_mode<synchronous>, transform_indices = @transform_4, window_bounds = array<i64: 1, 128>}, {pipeline_mode = #tpu.pipeline_mode<synchronous>, transform_indices = @transform_5, window_bounds = array<i64: 128, 128>}, {pipeline_mode = #tpu.pipeline_mode<synchronous>, transform_indices = @transform_6, window_bounds = array<i64: 1, 128>}, {transform_indices = @transform_7, window_bounds = array<i64: 8, 128>}]} {
    %c0 = arith.constant 0 : index
    %c0_0 = arith.constant 0 : index
    %0 = vector.load %arg1[%c0, %c0_0] : memref<8x8xf32, #tpu.memory_space<vmem>>, vector<8x8xf32>
    %1 = arith.truncf %0 : vector<8x8xf32> to vector<8x8xbf16>
    %c0_1 = arith.constant 0 : index
    %c0_2 = arith.constant 0 : index
    %2 = vector.load %arg2[%c0_1, %c0_2] : memref<8x128xbf16, #tpu.memory_space<vmem>>, vector<8x128xbf16>
    %cst = arith.constant dense<0.000000e+00> : vector<8x128xf32>
    %3 = tpu.matmul %1, %2, %cst {dimension_numbers = #tpu.dot_dimension_numbers<[1], [0], [0], [1], [0, 0, 1, 1], [], []>} : vector<8x8xbf16>, vector<8x128xbf16>, vector<8x128xf32> -> vector<8x128xf32>
    %c0_3 = arith.constant 0 : index
    %c0_4 = arith.constant 0 : index
    %4 = vector.load %arg3[%c0_3, %c0_4] : memref<1x128xf32, #tpu.memory_space<vmem>>, vector<1x128xf32>
    %5 = vector.broadcast %4 : vector<1x128xf32> to vector<8x128xf32>
    %6 = arith.addf %3, %5 : vector<8x128xf32>
    %cst_5 = arith.constant 0.000000e+00 : f32
    %7 = vector.broadcast %cst_5 : f32 to vector<8x128xf32>
    %8 = arith.maximumf %6, %7 : vector<8x128xf32>
    %9 = arith.truncf %8 : vector<8x128xf32> to vector<8x128xbf16>
    %c0_6 = arith.constant 0 : index
    %c0_7 = arith.constant 0 : index
    %10 = vector.load %arg4[%c0_6, %c0_7] : memref<128x128xbf16, #tpu.memory_space<vmem>>, vector<128x128xbf16>
    %cst_8 = arith.constant dense<0.000000e+00> : vector<8x128xf32>
    %11 = tpu.matmul %9, %10, %cst_8 {dimension_numbers = #tpu.dot_dimension_numbers<[1], [0], [0], [1], [0, 0, 1, 1], [], []>} : vector<8x128xbf16>, vector<128x128xbf16>, vector<8x128xf32> -> vector<8x128xf32>
    %c0_9 = arith.constant 0 : index
    %c0_10 = arith.constant 0 : index
    %12 = vector.load %arg5[%c0_9, %c0_10] : memref<1x128xf32, #tpu.memory_space<vmem>>, vector<1x128xf32>
    %13 = vector.broadcast %12 : vector<1x128xf32> to vector<8x128xf32>
    %14 = arith.addf %11, %13 : vector<8x128xf32>
    %cst_11 = arith.constant 0.000000e+00 : f32
    %15 = vector.broadcast %cst_11 : f32 to vector<8x128xf32>
    %16 = arith.maximumf %14, %15 : vector<8x128xf32>
    %17 = arith.truncf %16 : vector<8x128xf32> to vector<8x128xbf16>
    %c0_12 = arith.constant 0 : index
    %c0_13 = arith.constant 0 : index
    %18 = vector.load %arg6[%c0_12, %c0_13] : memref<128x128xbf16, #tpu.memory_space<vmem>>, vector<128x128xbf16>
    %cst_14 = arith.constant dense<0.000000e+00> : vector<8x128xf32>
    %19 = tpu.matmul %17, %18, %cst_14 {dimension_numbers = #tpu.dot_dimension_numbers<[1], [0], [0], [1], [0, 0, 1, 1], [], []>} : vector<8x128xbf16>, vector<128x128xbf16>, vector<8x128xf32> -> vector<8x128xf32>
    %c0_15 = arith.constant 0 : index
    %c0_16 = arith.constant 0 : index
    %20 = vector.load %arg7[%c0_15, %c0_16] : memref<1x128xf32, #tpu.memory_space<vmem>>, vector<1x128xf32>
    %21 = vector.broadcast %20 : vector<1x128xf32> to vector<8x128xf32>
    %22 = arith.addf %19, %21 : vector<8x128xf32>
    %23 = arith.truncf %22 : vector<8x128xf32> to vector<8x128xbf16>
    %c0_17 = arith.constant 0 : index
    %c0_18 = arith.constant 0 : index
    %24 = vector.load %arg8[%c0_17, %c0_18] : memref<8x128xbf16, #tpu.memory_space<vmem>>, vector<8x128xbf16>
    tpu.vector_store %arg8[%c0_17, %c0_18], %23 {strides = array<i32>} : memref<8x128xbf16, #tpu.memory_space<vmem>>, vector<8x128xbf16>,
    return
  }
  func.func @transform_0(%arg0: i32) -> (i32, i32) {
    %c0_i32 = arith.constant 0 : i32
    %c0_i32_0 = arith.constant 0 : i32
    return %arg0, %c0_i32 : i32, i32
  }
  func.func @transform_1(%arg0: i32) -> (i32, i32) {
    %c0_i32 = arith.constant 0 : i32
    %c0_i32_0 = arith.constant 0 : i32
    %c0_i32_1 = arith.constant 0 : i32
    return %c0_i32, %c0_i32_0 : i32, i32
  }
  func.func @transform_2(%arg0: i32) -> (i32, i32) {
    %c0_i32 = arith.constant 0 : i32
    %c0_i32_0 = arith.constant 0 : i32
    %c0_i32_1 = arith.constant 0 : i32
    return %c0_i32, %c0_i32_0 : i32, i32
  }
  func.func @transform_3(%arg0: i32) -> (i32, i32) {
    %c0_i32 = arith.constant 0 : i32
    %c0_i32_0 = arith.constant 0 : i32
    %c0_i32_1 = arith.constant 0 : i32
    return %c0_i32, %c0_i32_0 : i32, i32
  }
  func.func @transform_4(%arg0: i32) -> (i32, i32) {
    %c0_i32 = arith.constant 0 : i32
    %c0_i32_0 = arith.constant 0 : i32
    %c0_i32_1 = arith.constant 0 : i32
    return %c0_i32, %c0_i32_0 : i32, i32
  }
  func.func @transform_5(%arg0: i32) -> (i32, i32) {
    %c0_i32 = arith.constant 0 : i32
    %c0_i32_0 = arith.constant 0 : i32
    %c0_i32_1 = arith.constant 0 : i32
    return %c0_i32, %c0_i32_0 : i32, i32
  }
  func.func @transform_6(%arg0: i32) -> (i32, i32) {
    %c0_i32 = arith.constant 0 : i32
    %c0_i32_0 = arith.constant 0 : i32
    %c0_i32_1 = arith.constant 0 : i32
    return %c0_i32, %c0_i32_0 : i32, i32
  }
  func.func @transform_7(%arg0: i32) -> (i32, i32) {
    %c0_i32 = arith.constant 0 : i32
    %c0_i32_0 = arith.constant 0 : i32
    return %arg0, %c0_i32 : i32, i32
  }
}

</mosaic_0001>

<llo_original>
// kernel: tpu_custom_call.1
$region0: #{tpu_custom_call.1}
  #allocation0 [shape = 'u32[]', space=smem, size = 0x4, offset = 0x4, fixed_abs, tag = 'smem constant byte address 0x4 - core index']
  #allocation1 [shape = 'u32[72,128]{1,0:T(1,128)}', space=vmem, size = 0x9000, scoped, tag = 'internal scratch']
  %s0 = inlined_call_operand.hbm [shape: f32[8,8], index: 0, kind: input, shape index: {}]
  %s1 = inlined_call_operand.hbm [shape: bf16[8,128], index: 1, kind: input, shape index: {}]
  %s2 = inlined_call_operand.vmem [shape: f32[1,128], index: 2, kind: input, shape index: {}]
  %s3 = inlined_call_operand.hbm [shape: bf16[128,128], index: 3, kind: input, shape index: {}]
  %s4 = inlined_call_operand.vmem [shape: f32[1,128], index: 4, kind: input, shape index: {}]
  %s5 = inlined_call_operand.hbm [shape: bf16[128,128], index: 5, kind: input, shape index: {}]
  %s6 = inlined_call_operand.vmem [shape: f32[1,128], index: 6, kind: input, shape index: {}]
  %s7 = inlined_call_operand.hbm [shape: bf16[8,128], index: 7, kind: output, shape index: {}]
  %s8 = sld [smem:[#allocation0]]
  $region54: #{tpu_custom_call.1} parent=0
    _
  %s10 = ssub.s32 1, %s8
  %s11 = scalar_select 0, %s10, %s8
  $region1: #{tpu_custom_call.1} parent=0
    #allocation2 [shape = 'u8[4096]{0}', space=vmem, size = 0x1000, scoped, tag = 'input window, operand 0, single buffered']
    #allocation3 [shape = 's32[1]{0}', space=sflag, size = 0x4, scoped, tag = 'scoped memory for tpu_custom_call.1']
    #allocation4 [shape = 's32[1]{0}', space=sflag, size = 0x4, scoped, tag = 'scoped memory for tpu_custom_call.1']
    #allocation5 [shape = 'u8[2048]{0}', space=vmem, size = 0x800, scoped, tag = 'input window, operand 1, single buffered']
    #allocation6 [shape = 's32[1]{0}', space=sflag, size = 0x4, scoped, tag = 'scoped memory for tpu_custom_call.1']
    #allocation7 [shape = 'u8[32768]{0}', space=vmem, size = 0x8000, scoped, tag = 'input window, operand 3, single buffered']
    #allocation8 [shape = 'u8[32768]{0}', space=vmem, size = 0x8000, scoped, tag = 'input window, operand 5, single buffered']
    #allocation9 [shape = 's32[1]{0}', space=sflag, size = 0x4, scoped, tag = 'scoped memory for tpu_custom_call.1']
    #allocation10 [shape = 'u8[2048]{0}', space=vmem, size = 0x800, scoped, tag = 'output window, operand 0, single buffered']
    %12 = vsyncpa [#allocation3], 0
    %13 = vsyncpa [#allocation6], 0
    %14 = vsyncpa [#allocation9], 0
    %15 = vsyncpa [#allocation4], 0
    // Predicated region
    $region2: #{tpu_custom_call.1} parent=1 // pred_check
      _
    $region3: #{tpu_custom_call.1} parent=1 // pred_check_branch
      %17 = sbr.rel (0) target = $region5
    $region4: #{tpu_custom_call.1} parent=1 // pred_region
      %19 = vsyncadd [#allocation3], 0
      %s21 = sshll.u32 %s0, 4
      %s22 = int_to_ptr.hbm [resolvable:$true] %s21
      %s23 = sshll.u32 [#allocation2], 4
      %s24 = int_to_ptr.vmem [resolvable:$true] %s23
      %26 = dma.hbm_to_vmem [thread:$0]  %s22, 128, %s24, [#allocation3]
    $region5: #{tpu_custom_call.1} parent=1 // pred_fallthru
      _
    // Predicated region
    $region6: #{tpu_custom_call.1} parent=1 // pred_check
      _
    $region7: #{tpu_custom_call.1} parent=1 // pred_check_branch
      %28 = sbr.rel (0) target = $region9
    $region8: #{tpu_custom_call.1} parent=1 // pred_region
      %30 = vsyncadd [#allocation6], 0
      %s32 = sshll.u32 %s1, 4
      %s33 = int_to_ptr.hbm [resolvable:$true] %s32
      %s34 = sshll.u32 [#allocation5], 4
      %s35 = int_to_ptr.vmem [resolvable:$true] %s34
      %37 = dma.hbm_to_vmem [thread:$0]  %s33, 64, %s35, [#allocation6]
    $region9: #{tpu_custom_call.1} parent=1 // pred_fallthru
      _
    // Predicated region
    $region10: #{tpu_custom_call.1} parent=1 // pred_check
      _
    $region11: #{tpu_custom_call.1} parent=1 // pred_check_branch
      %39 = sbr.rel (0) target = $region13
    $region12: #{tpu_custom_call.1} parent=1 // pred_region
      _
    $region13: #{tpu_custom_call.1} parent=1 // pred_fallthru
      _
    // Predicated region
    $region14: #{tpu_custom_call.1} parent=1 // pred_check
      _
    $region15: #{tpu_custom_call.1} parent=1 // pred_check_branch
      %41 = sbr.rel (0) target = $region17
    $region16: #{tpu_custom_call.1} parent=1 // pred_region
      %43 = vsyncadd [#allocation6], 0
      %s44 = sshll.u32 %s3, 4
      %s45 = int_to_ptr.hbm [resolvable:$true] %s44
      %s46 = sshll.u32 [#allocation7], 4
      %s47 = int_to_ptr.vmem [resolvable:$true] %s46
      %52 = dma.hbm_to_vmem [thread:$0]  %s45, 1024, %s47, [#allocation6], 64, 64, 4
    $region17: #{tpu_custom_call.1} parent=1 // pred_fallthru
      _
    // Predicated region
    $region18: #{tpu_custom_call.1} parent=1 // pred_check
      _
    $region19: #{tpu_custom_call.1} parent=1 // pred_check_branch
      %54 = sbr.rel (0) target = $region21
    $region20: #{tpu_custom_call.1} parent=1 // pred_region
      _
    $region21: #{tpu_custom_call.1} parent=1 // pred_fallthru
      _
    // Predicated region
    $region22: #{tpu_custom_call.1} parent=1 // pred_check
      _
    $region23: #{tpu_custom_call.1} parent=1 // pred_check_branch
      %56 = sbr.rel (0) target = $region25
    $region24: #{tpu_custom_call.1} parent=1 // pred_region
      %58 = vsyncadd [#allocation9], 0
      %s59 = sshll.u32 %s5, 4
      %s60 = int_to_ptr.hbm [resolvable:$true] %s59
      %s61 = sshll.u32 [#allocation8], 4
      %s62 = int_to_ptr.vmem [resolvable:$true] %s61
      %67 = dma.hbm_to_vmem [thread:$0]  %s60, 1024, %s62, [#allocation9], 64, 64, 4
    $region25: #{tpu_custom_call.1} parent=1 // pred_fallthru
      _
    // Predicated region
    $region26: #{tpu_custom_call.1} parent=1 // pred_check
      _
    $region27: #{tpu_custom_call.1} parent=1 // pred_check_branch
      %69 = sbr.rel (0) target = $region29
    $region28: #{tpu_custom_call.1} parent=1 // pred_region
      _
    $region29: #{tpu_custom_call.1} parent=1 // pred_fallthru
      _
    // Predicated region
    $region30: #{tpu_custom_call.1} parent=1 // pred_check
      _
    $region31: #{tpu_custom_call.1} parent=1 // pred_check_branch
      %71 = sbr.rel (0) target = $region33
    $region32: #{tpu_custom_call.1} parent=1 // pred_region
      %73 = dma.done [#allocation3], 128
    $region33: #{tpu_custom_call.1} parent=1 // pred_fallthru
      _
    // Predicated region
    $region34: #{tpu_custom_call.1} parent=1 // pred_check
      _
    $region35: #{tpu_custom_call.1} parent=1 // pred_check_branch
      %75 = sbr.rel (0) target = $region37
    $region36: #{tpu_custom_call.1} parent=1 // pred_region
      %77 = dma.done [#allocation6], 64
    $region37: #{tpu_custom_call.1} parent=1 // pred_fallthru
      _
    // Predicated region
    $region38: #{tpu_custom_call.1} parent=1 // pred_check
      _
    $region39: #{tpu_custom_call.1} parent=1 // pred_check_branch
      %79 = sbr.rel (0) target = $region41
    $region40: #{tpu_custom_call.1} parent=1 // pred_region
      %81 = dma.done [#allocation6], 1024
    $region41: #{tpu_custom_call.1} parent=1 // pred_fallthru
      _
    // Predicated region
    $region42: #{tpu_custom_call.1} parent=1 // pred_check
      _
    $region43: #{tpu_custom_call.1} parent=1 // pred_check_branch
      %83 = sbr.rel (0) target = $region45
    $region44: #{tpu_custom_call.1} parent=1 // pred_region
      %85 = dma.done [#allocation9], 1024
    $region45: #{tpu_custom_call.1} parent=1 // pred_fallthru
      _
    %v87 = vld [vmem:[#allocation2] sm:$0xff]
    %v88 = vpack.c.bf16 %v87, %v87
    %v89 = vld [vmem:[#allocation5] sm:$0xf]
    %v90 = vld [vmem:[%s2] sm:$0x1]
    %v92 = vperm.slane %v90, 0
    %vm94 = vcmask 64512
    %v96 = vsel %vm94, %v88, 0
    %vm98 = vcmask 1043456
    %v100 = vsel %vm98, %v89, 0
    %102 = vmatpush.bf16.msra.mxu0 0
    %103 = vmatpush.bf16.msra.mxu0 0
    %104 = vmatpush.bf16.msra.mxu0 0
    %105 = vmatpush.bf16.msra.mxu0 0
    %106 = vmatpush.bf16.msra.mxu0 0
    %107 = vmatpush.bf16.msra.mxu0 0
    %108 = vmatpush.bf16.msra.mxu0 0
    %109 = vmatpush.bf16.msra.mxu0 %v100
    %110 = vmatmul.bf16.gmra.mxu0 %v96
    %v111 = vpop.f32.mrf.mxu0
    %v112 = vadd.f32 %v92, %v111
    %v113 = vpop.f32.mrf.mxu0
    %114 = vdwg.mxu0
    %v115 = vmax.f32 %v112, 0.0
    %v116 = vpack.c.bf16 %v115, %v115
    %v117 = vld [vmem:[#allocation7] sm:$0xf]
    %v118 = vld [vmem:[#allocation7 + $0x4] sm:$0xf]
    %v119 = vld [vmem:[#allocation7 + $0x8] sm:$0xf]
    %v120 = vld [vmem:[#allocation7 + $0xc] sm:$0xf]
    %v121 = vld [vmem:[#allocation7 + $0x10] sm:$0xf]
    %v122 = vld [vmem:[#allocation7 + $0x14] sm:$0xf]
    %v123 = vld [vmem:[#allocation7 + $0x18] sm:$0xf]
    %v124 = vld [vmem:[#allocation7 + $0x1c] sm:$0xf]
    %v125 = vld [vmem:[#allocation7 + $0x20] sm:$0xf]
    %v126 = vld [vmem:[#allocation7 + $0x24] sm:$0xf]
    %v127 = vld [vmem:[#allocation7 + $0x28] sm:$0xf]
    %v128 = vld [vmem:[#allocation7 + $0x2c] sm:$0xf]
    %v129 = vld [vmem:[#allocation7 + $0x30] sm:$0xf]
    %v130 = vld [vmem:[#allocation7 + $0x34] sm:$0xf]
    %v131 = vld [vmem:[#allocation7 + $0x38] sm:$0xf]
    %v132 = vld [vmem:[#allocation7 + $0x3c] sm:$0xf]
    %v133 = vld [vmem:[%s4] sm:$0x1]
    %v135 = vperm.slane %v133, 0
    %v153 = vunpack.c.l.b16 %v117
    %v154 = vunpack.c.l.b16 %v118
    %v155 = vunpack.c.l.b16 %v119
    %v156 = vunpack.c.l.b16 %v120
    %v157 = vunpack.c.l.b16 %v121
    %v158 = vunpack.c.l.b16 %v122
    %v159 = vunpack.c.l.b16 %v123
    %v160 = vunpack.c.l.b16 %v124
    %v161 = vunpack.c.l.b16 %v125
    %v162 = vunpack.c.l.b16 %v126
    %v163 = vunpack.c.l.b16 %v127
    %v164 = vunpack.c.l.b16 %v128
    %v165 = vunpack.c.l.b16 %v129
    %v166 = vunpack.c.l.b16 %v130
    %v167 = vunpack.c.l.b16 %v131
    %v168 = vunpack.c.l.b16 %v132
    %v169 = vpack.c.b16 %v154, %v153
    %v170 = vpack.c.b16 %v156, %v155
    %v171 = vpack.c.b16 %v158, %v157
    %v172 = vpack.c.b16 %v160, %v159
    %v173 = vpack.c.b16 %v162, %v161
    %v174 = vpack.c.b16 %v164, %v163
    %v175 = vpack.c.b16 %v166, %v165
    %v176 = vpack.c.b16 %v168, %v167
    %185 = vmatpush.bf16.msra.mxu0 %v176
    %186 = vmatpush.bf16.msra.mxu0 %v175
    %187 = vmatpush.bf16.msra.mxu0 %v174
    %188 = vmatpush.bf16.msra.mxu0 %v173
    %189 = vmatpush.bf16.msra.mxu0 %v172
    %190 = vmatpush.bf16.msra.mxu0 %v171
    %191 = vmatpush.bf16.msra.mxu0 %v170
    %192 = vmatpush.bf16.msra.mxu0 %v169
    %193 = vmatmul.bf16.gmra.mxu0 %v116
    %v194 = vpop.f32.mrf.mxu0
    %v195 = vadd.f32 %v135, %v194
    %v196 = vpop.f32.mrf.mxu0
    %197 = vdwg.mxu0
    %v198 = vmax.f32 %v195, 0.0
    %v199 = vpack.c.bf16 %v198, %v198
    %v200 = vld [vmem:[#allocation8] sm:$0xf]
    %v201 = vld [vmem:[#allocation8 + $0x4] sm:$0xf]
    %v202 = vld [vmem:[#allocation8 + $0x8] sm:$0xf]
    %v203 = vld [vmem:[#allocation8 + $0xc] sm:$0xf]
    %v204 = vld [vmem:[#allocation8 + $0x10] sm:$0xf]
    %v205 = vld [vmem:[#allocation8 + $0x14] sm:$0xf]
    %v206 = vld [vmem:[#allocation8 + $0x18] sm:$0xf]
    %v207 = vld [vmem:[#allocation8 + $0x1c] sm:$0xf]
    %v208 = vld [vmem:[#allocation8 + $0x20] sm:$0xf]
    %v209 = vld [vmem:[#allocation8 + $0x24] sm:$0xf]
    %v210 = vld [vmem:[#allocation8 + $0x28] sm:$0xf]
    %v211 = vld [vmem:[#allocation8 + $0x2c] sm:$0xf]
    %v212 = vld [vmem:[#allocation8 + $0x30] sm:$0xf]
    %v213 = vld [vmem:[#allocation8 + $0x34] sm:$0xf]
    %v214 = vld [vmem:[#allocation8 + $0x38] sm:$0xf]
    %v215 = vld [vmem:[#allocation8 + $0x3c] sm:$0xf]
    %v216 = vld [vmem:[%s6] sm:$0x1]
    %v218 = vperm.slane %v216, 0
    %v236 = vunpack.c.l.b16 %v200
    %v237 = vunpack.c.l.b16 %v201
    %v238 = vunpack.c.l.b16 %v202
    %v239 = vunpack.c.l.b16 %v203
    %v240 = vunpack.c.l.b16 %v204
    %v241 = vunpack.c.l.b16 %v205
    %v242 = vunpack.c.l.b16 %v206
    %v243 = vunpack.c.l.b16 %v207
    %v244 = vunpack.c.l.b16 %v208
    %v245 = vunpack.c.l.b16 %v209
    %v246 = vunpack.c.l.b16 %v210
    %v247 = vunpack.c.l.b16 %v211
    %v248 = vunpack.c.l.b16 %v212
    %v249 = vunpack.c.l.b16 %v213
    %v250 = vunpack.c.l.b16 %v214
    %v251 = vunpack.c.l.b16 %v215
    %v252 = vpack.c.b16 %v237, %v236
    %v253 = vpack.c.b16 %v239, %v238
    %v254 = vpack.c.b16 %v241, %v240
    %v255 = vpack.c.b16 %v243, %v242
    %v256 = vpack.c.b16 %v245, %v244
    %v257 = vpack.c.b16 %v247, %v246
    %v258 = vpack.c.b16 %v249, %v248
    %v259 = vpack.c.b16 %v251, %v250
    %268 = vmatpush.bf16.msra.mxu0 %v259
    %269 = vmatpush.bf16.msra.mxu0 %v258
    %270 = vmatpush.bf16.msra.mxu0 %v257
    %271 = vmatpush.bf16.msra.mxu0 %v256
    %272 = vmatpush.bf16.msra.mxu0 %v255
    %273 = vmatpush.bf16.msra.mxu0 %v254
    %274 = vmatpush.bf16.msra.mxu0 %v253
    %275 = vmatpush.bf16.msra.mxu0 %v252
    %276 = vmatmul.bf16.gmra.mxu0 %v199
    %v277 = vpop.f32.mrf.mxu0
    %v278 = vadd.f32 %v218, %v277
    %v279 = vpop.f32.mrf.mxu0
    %280 = vdwg.mxu0
    %v281 = vpack.c.bf16 %v278, %v278
    %282 = vst [vmem:[#allocation10] sm:$0xf] %v281
    // Predicated region
    $region46: #{tpu_custom_call.1} parent=1 // pred_check
      _
    $region47: #{tpu_custom_call.1} parent=1 // pred_check_branch
      %284 = sbr.rel (0) target = $region49
    $region48: #{tpu_custom_call.1} parent=1 // pred_region
      %286 = vsyncadd [#allocation4], 0
      %s288 = sshll.u32 [#allocation10], 4
      %s289 = int_to_ptr.vmem [resolvable:$true] %s288
      %s290 = sshll.u32 %s7, 4
      %s291 = int_to_ptr.hbm [resolvable:$true] %s290
      %293 = dma.vmem_to_hbm [thread:$0]  %s289, 64, %s291, [#allocation4]
    $region49: #{tpu_custom_call.1} parent=1 // pred_fallthru
      _
    // Predicated region
    $region50: #{tpu_custom_call.1} parent=1 // pred_check
      _
    $region51: #{tpu_custom_call.1} parent=1 // pred_check_branch
      %295 = sbr.rel (0) target = $region53
    $region52: #{tpu_custom_call.1} parent=1 // pred_region
      %297 = dma.done [#allocation4], 64
    $region53: #{tpu_custom_call.1} parent=1 // pred_fallthru
      _
    %298 = vsyncpa [#allocation3], 1
    %299 = vsyncpa [#allocation6], 1
    %300 = vsyncpa [#allocation9], 1
    %301 = vsyncpa [#allocation4], 1

</llo_original>
